<compile_context>
chip_gen: v6e
topology: v6e:2x2x1
jax: 0.10.0
libtpu: 0.0.40
codegen_flags: <defaults>
</compile_context>

<pallas_src>
import jax
import jax.numpy as jnp
from jax.experimental import pallas as pl
from jax.experimental.pallas import tpu as pltpu


def _round_up(a, m):
    return ((a + m - 1) // m) * m


def _pick_tile(N, B, requested):
    """Spatial (lane) tile: large enough to amortize per-step overhead, a divisor of N when
    cheaply possible (avoids a ragged final block), and small enough that a B==1 call still
    gives >= 2 grid steps (v7x has 2 TensorCores)."""
    requested = max(128, int(requested))
    if N <= requested:
        if B == 1 and N > 256:
            return _round_up(pl.cdiv(N, 2), 128)     # two steps -> both v7x TCs get work
        return N                                      # one full-row block, no masking needed
    tn = _round_up(requested, 128)
    cand = tn
    while cand >= 128 and tn - cand <= 2048:
        if N % cand == 0:                             # exact divisor: no ragged block at all
            return cand
        cand -= 128
    return tn                                         # ragged final block; Pallas masks it


def _focus_conv_kernel(w_ref, x_ref, b_ref, o_ref):
    # 1x1 conv == (C2, Cin) @ (Cin, tn) on the MXU with f32 accumulation (spatial on lanes).
    acc = jnp.dot(w_ref[...], x_ref[...], preferred_element_type=jnp.float32)
    y = acc + b_ref[...]                              # folded-BN bias (lane broadcast)
    # SiLU(y) = y * sigmoid(y) = y / (1 + exp(-y)); exp + approx reciprocal live on the EUP.
    o_ref[...] = (y * pl.reciprocal(1.0 + jnp.exp(-y), approx=True)).astype(o_ref.dtype)


def focus_forward(x, w_conv, bn_gamma, bn_beta, bn_mean, bn_var,
                  eps=1e-5, tn=8192, out_dtype=jnp.bfloat16):
    """x: NCHW float32 [B, C1, H, W] (H, W even). Returns NCHW [B, C2, H//2, W//2] of out_dtype."""
    B, C1, H, W = x.shape
    C2 = w_conv.shape[0]
    Ho, Wo = H // 2, W // 2
    Cin = 4 * C1
    N = Ho * Wo

    # --- space-to-depth as ONE fused XLA reshape/transpose/cast -------------------------
    # h = 2*ho + dh, w = 2*wo + dw. New channel index = (dh + 2*dw)*C1 + c, exactly torch's
    # concat order [::2,::2], [1::2,::2], [::2,1::2], [1::2,1::2] -> no weight permutation.
    x6 = x.reshape(B, C1, Ho, 2, Wo, 2)               # (b, c, ho, dh, wo, dw)
    xc = jnp.transpose(x6, (0, 5, 3, 1, 2, 4))        # (b, dw, dh, c, ho, wo)
    x_bf16 = xc.reshape(B, Cin, N).astype(jnp.bfloat16)   # NCHW-flat spatial, bf16 stream

    # --- fold BatchNorm (inference) into the conv: W' = scale*W ; b' = beta - mean*scale --
    scale = bn_gamma / jnp.sqrt(bn_var + eps)                          # (C2,)
    w_fold = (w_conv[:, :, 0, 0].astype(jnp.float32) * scale[:, None]).astype(jnp.bfloat16)
    b_fold = (bn_beta - bn_mean * scale).reshape(C2, 1).astype(jnp.float32)

    # --- tiling / resources ---------------------------------------------------------------
    tn = _pick_tile(N, B, tn)
    n_tiles = pl.cdiv(N, tn)
    out_bytes = jnp.dtype(out_dtype).itemsize
    # double-buffered activation + output tiles, plus resident weight/bias, plus headroom
    vmem_need = 2 * (Cin * tn * 2 + C2 * tn * out_bytes) + 2 * (C2 * Cin * 2 + C2 * 4)
    vmem_limit = int(min(max(2 * vmem_need + (8 << 20), 32 << 20), 56 << 20))  # < v7x 64 MiB

    y = pl.pallas_call(
        _focus_conv_kernel,
        out_shape=jax.ShapeDtypeStruct((B, C2, N), out_dtype),
        grid_spec=pltpu.PrefetchScalarGridSpec(
            num_scalar_prefetch=0,
            grid=(B, n_tiles),
            in_specs=[
                pl.BlockSpec((C2, Cin), lambda b, j: (0, 0)),           # resident folded weight
                pl.BlockSpec((None, Cin, tn), lambda b, j: (b, 0, j)),  # lane-dense activation
                pl.BlockSpec((C2, 1), lambda b, j: (0, 0)),             # folded BN bias
            ],
            out_specs=pl.BlockSpec((None, C2, tn), lambda b, j: (b, 0, j)),
        ),
        compiler_params=pltpu.CompilerParams(
            # two parallel axes -> shardable across v7x's 2 TCs; harmless on v5e/v6e
            dimension_semantics=("parallel", "parallel"),
            vmem_limit_bytes=vmem_limit,
        ),
    )(w_fold, x_bf16, b_fold)

    # Output is already NCHW-flat: this reshape is layout-free (no extra HBM round trip).
    return y.reshape(B, C2, Ho, Wo)


def _reference(x, w_conv, bn_gamma, bn_beta, bn_mean, bn_var, eps=1e-5):
    """Plain-JAX f32 reference matching the PyTorch module (eval mode)."""
    slices = [
        x[:, :, ::2, ::2],
        x[:, :, 1::2, ::2],
        x[:, :, ::2, 1::2],
        x[:, :, 1::2, 1::2],
    ]
    xc = jnp.concatenate(slices, axis=1)                 # [B, 4C1, Ho, Wo]
    y = jnp.einsum("bchw,oc->bohw", xc, w_conv[:, :, 0, 0],
                   precision=jax.lax.Precision.HIGHEST)
    scale = bn_gamma / jnp.sqrt(bn_var + eps)
    y = y * scale[None, :, None, None] + (bn_beta - bn_mean * scale)[None, :, None, None]
    return y * jax.nn.sigmoid(y)


if __name__ == "__main__":
    # Deterministic synthetic parameters (Focus(c1=4, c2=8, k1=1))
    B, C1, H, W = 2, 4, 16, 16
    C2 = 8
    Cin = 4 * C1

    key = jax.random.PRNGKey(0)
    kx, kw, kg, kb, km, kv = jax.random.split(key, 6)

    x = jax.random.normal(kx, (B, C1, H, W), dtype=jnp.float32)
    w_conv = jax.random.normal(kw, (C2, Cin, 1, 1), dtype=jnp.float32) * 0.1
    bn_gamma = 1.0 + 0.1 * jax.random.normal(kg, (C2,), dtype=jnp.float32)
    bn_beta = 0.1 * jax.random.normal(kb, (C2,), dtype=jnp.float32)
    bn_mean = 0.1 * jax.random.normal(km, (C2,), dtype=jnp.float32)
    bn_var = jnp.abs(1.0 + 0.1 * jax.random.normal(kv, (C2,), dtype=jnp.float32))

    ref = _reference(x, w_conv, bn_gamma, bn_beta, bn_mean, bn_var)

    # Default bf16-output path (dominant HBM stream halved for bf16 consumers downstream).
    out_bf16 = jax.block_until_ready(
        focus_forward(x, w_conv, bn_gamma, bn_beta, bn_mean, bn_var))
    assert out_bf16.shape == (B, C2, H // 2, W // 2), out_bf16.shape
    assert out_bf16.dtype == jnp.bfloat16, out_bf16.dtype
    err_b = float(jnp.max(jnp.abs(out_bf16.astype(jnp.float32) - ref)))
    assert jnp.allclose(out_bf16.astype(jnp.float32), ref, atol=4e-2, rtol=4e-2), \
        f"bf16-output mismatch vs reference: {err_b}"

    # f32-output path (tighter tolerance; only bf16 inputs/weights + approx reciprocal differ).
    out_f32 = jax.block_until_ready(
        focus_forward(x, w_conv, bn_gamma, bn_beta, bn_mean, bn_var, out_dtype=jnp.float32))
    assert out_f32.shape == (B, C2, H // 2, W // 2), out_f32.shape
    err_f = float(jnp.max(jnp.abs(out_f32 - ref)))
    assert jnp.allclose(out_f32, ref, atol=3e-2, rtol=3e-2), \
        f"f32-output mismatch vs reference: {err_f}"

    print("KERNEL_OK")
</pallas_src>

<mosaic_0001>
module attributes {stable_mosaic.version = 11 : i64} {
  func.func @_focus_conv_kernel(%arg0: i32, %arg1: i32, %arg2: memref<8x16xbf16, #tpu.memory_space<vmem>>, %arg3: memref<1x16x64xbf16, #tpu.memory_space<vmem>>, %arg4: memref<8x1xf32, #tpu.memory_space<vmem>>, %arg5: memref<1x8x64xbf16, #tpu.memory_space<vmem>>) attributes {dimension_semantics = [#tpu.dimension_semantics<parallel>, #tpu.dimension_semantics<parallel>], iteration_bounds = array<i64: 2, 1>, scalar_prefetch = 0 : i64, scratch_operands = 0 : i64, tpu.core_type = #tpu.core_type<tc>, window_params = [{pipeline_mode = #tpu.pipeline_mode<synchronous>, transform_indices = @transform_0, window_bounds = array<i64: 8, 16>}, {transform_indices = @transform_1, window_bounds = array<i64: 1, 16, 64>}, {pipeline_mode = #tpu.pipeline_mode<synchronous>, transform_indices = @transform_2, window_bounds = array<i64: 8, 1>}, {transform_indices = @transform_3, window_bounds = array<i64: 1, 8, 64>}]} {
    %c0 = arith.constant 0 : index
    %c0_0 = arith.constant 0 : index
    %0 = vector.load %arg2[%c0, %c0_0] : memref<8x16xbf16, #tpu.memory_space<vmem>>, vector<8x16xbf16>
    %c0_1 = arith.constant 0 : index
    %c0_2 = arith.constant 0 : index
    %c0_3 = arith.constant 0 : index
    %1 = vector.load %arg3[%c0_1, %c0_2, %c0_3] : memref<1x16x64xbf16, #tpu.memory_space<vmem>>, vector<1x16x64xbf16>
    %2 = vector.shape_cast %1 : vector<1x16x64xbf16> to vector<16x64xbf16>
    %cst = arith.constant dense<0.000000e+00> : vector<8x64xf32>
    %3 = tpu.matmul %0, %2, %cst {dimension_numbers = #tpu.dot_dimension_numbers<[1], [0], [0], [1], [0, 0, 1, 1], [], []>} : vector<8x16xbf16>, vector<16x64xbf16>, vector<8x64xf32> -> vector<8x64xf32>
    %c0_4 = arith.constant 0 : index
    %c0_5 = arith.constant 0 : index
    %4 = vector.load %arg4[%c0_4, %c0_5] : memref<8x1xf32, #tpu.memory_space<vmem>>, vector<8x1xf32>
    %5 = vector.broadcast %4 : vector<8x1xf32> to vector<8x64xf32>
    %6 = arith.addf %3, %5 : vector<8x64xf32>
    %cst_6 = arith.constant 0.000000e+00 : f32
    %7 = vector.broadcast %cst_6 : f32 to vector<8x64xf32>
    %8 = arith.subf %7, %6 : vector<8x64xf32>
    %9 = math.exp %8 : vector<8x64xf32>
    %cst_7 = arith.constant 1.000000e+00 : f32
    %10 = vector.broadcast %cst_7 : f32 to vector<8x64xf32>
    %11 = arith.addf %10, %9 : vector<8x64xf32>
    %12 = tpu.reciprocal %11 {approx = true} : vector<8x64xf32> -> vector<8x64xf32>
    %13 = arith.mulf %6, %12 : vector<8x64xf32>
    %14 = arith.truncf %13 : vector<8x64xf32> to vector<8x64xbf16>
    %c0_8 = arith.constant 0 : index
    %c0_9 = arith.constant 0 : index
    %c0_10 = arith.constant 0 : index
    %15 = vector.load %arg5[%c0_8, %c0_9, %c0_10] : memref<1x8x64xbf16, #tpu.memory_space<vmem>>, vector<1x8x64xbf16>
    %16 = vector.shape_cast %15 : vector<1x8x64xbf16> to vector<8x64xbf16>
    %17 = vector.shape_cast %14 : vector<8x64xbf16> to vector<1x8x64xbf16>
    tpu.vector_store %arg5[%c0_8, %c0_9, %c0_10], %17 {strides = array<i32>} : memref<1x8x64xbf16, #tpu.memory_space<vmem>>, vector<1x8x64xbf16>,
    return
  }
  func.func @transform_0(%arg0: i32, %arg1: i32) -> (i32, i32) {
    %c0_i32 = arith.constant 0 : i32
    %c0_i32_0 = arith.constant 0 : i32
    %c0_i32_1 = arith.constant 0 : i32
    return %c0_i32, %c0_i32_0 : i32, i32
  }
  func.func @transform_1(%arg0: i32, %arg1: i32) -> (i32, i32, i32) {
    %c0_i32 = arith.constant 0 : i32
    %c0_i32_0 = arith.constant 0 : i32
    return %arg0, %c0_i32, %arg1 : i32, i32, i32
  }
  func.func @transform_2(%arg0: i32, %arg1: i32) -> (i32, i32) {
    %c0_i32 = arith.constant 0 : i32
    %c0_i32_0 = arith.constant 0 : i32
    %c0_i32_1 = arith.constant 0 : i32
    return %c0_i32, %c0_i32_0 : i32, i32
  }
  func.func @transform_3(%arg0: i32, %arg1: i32) -> (i32, i32, i32) {
    %c0_i32 = arith.constant 0 : i32
    %c0_i32_0 = arith.constant 0 : i32
    return %arg0, %c0_i32, %arg1 : i32, i32, i32
  }
}

</mosaic_0001>

<llo_original>
// kernel: tpu_custom_call.1
$region0: #{tpu_custom_call.1}
  #allocation0 [shape = 'u32[]', space=smem, size = 0x4, offset = 0x4, fixed_abs, tag = 'smem constant byte address 0x4 - core index']
  #allocation1 [shape = 'u32[144,128]{1,0:T(1,128)}', space=vmem, size = 0x12000, scoped, tag = 'internal scratch']
  %s0 = inlined_call_operand.vmem [shape: bf16[8,16], index: 0, kind: input, shape index: {}]
  %s1 = inlined_call_operand.hbm [shape: bf16[2,16,64], index: 1, kind: input, shape index: {}]
  %s2 = inlined_call_operand.vmem [shape: f32[8,1], index: 2, kind: input, shape index: {}]
  %s3 = inlined_call_operand.hbm [shape: bf16[2,8,64], index: 3, kind: output, shape index: {}]
  %s4 = sld [smem:[#allocation0]]
  $region49: #{tpu_custom_call.1} parent=0
    _
  %s6 = ssub.s32 1, %s4
  %s7 = scalar_select 0, %s6, %s4
  $region1: #{tpu_custom_call.1} parent=0
    #allocation2 [shape = 'u8[8192]{0}', space=vmem, size = 0x2000, scoped, tag = 'input window, operand 1']
    #allocation3 [shape = 's32[2]{0}', space=sflag, size = 0x8, scoped, tag = 'scoped memory for tpu_custom_call.1']
    #allocation4 [shape = 's32[2]{0}', space=sflag, size = 0x8, scoped, tag = 'scoped memory for tpu_custom_call.1']
    #allocation5 [shape = 'u8[4096]{0}', space=vmem, size = 0x1000, scoped, tag = 'output window, operand 0']
    %8 = vsyncpa [#allocation3], 0
    %s9 = scalar_lea.sflag [#allocation3], 1
    %10 = vsyncpa %s9, 0
    %11 = vsyncpa [#allocation4], 0
    %s12 = scalar_lea.sflag [#allocation4], 1
    %13 = vsyncpa %s12, 0
    loop: start=0, step=1, limit=4
    $region2: #{tpu_custom_call.1} parent=1 // loop_pre_header
      _
    $region3: #{tpu_custom_call.1} parent=1 // loop_header
      %s15 = sphi 0, %s19
      %p16 = scmp.ge.s32.totalorder %s15, 4
      %s22 = sphi 0, %s34
      %s23 = sphi 0, %s30
      %s24 = sphi 0, %s22
      %s25 = sphi 0, %s23
      %s26 = sphi 0, %s24
      %s27 = sphi 0, %s25
      %s35 = sphi 0, %s35
      %s37 = sphi 0, %s35
      %s38 = sphi 0, %s37
      %s52 = sphi 0, %s38
      %s60 = sphi 0, %s62
      %s63 = sphi 0, %s60
      %s64 = sphi 0, %s63
      %s80 = sphi 0, %s64
      %s84 = sphi 0, %s84
      %s86 = sphi 0, %s84
      %s87 = sphi 0, %s86
      %s101 = sphi 0, %s87
      %s109 = sphi 0, %s111
      %s112 = sphi 0, %s109
      %s113 = sphi 0, %s112
      %s129 = sphi 0, %s113
    $region4: #{tpu_custom_call.1} parent=1 // loop_header_branch
      %18 = sbr.rel (%p16) target = $region8
    $region5: #{tpu_custom_call.1} parent=1 // loop_body
      %s20 = ssub.s32 %s15, 1
      %s21 = ssub.s32 %s15, 2
      %s28 = sadd.s32 1, %s23
      %p29 = scmp.ge.s32.totalorder %s28, 1
      %s30 = scalar_select %p29, 0, %s28
      %s31 = sadd.s32 1, %s22
      %s32 = scalar_select %p29, %s31, %s22
      %p33 = scmp.ge.s32.totalorder %s32, 2
      %s34 = scalar_select %p33, 0, %s32
      %s36 = sadd.s32 %s35, 1
      %p39 = scmp.eq.s32.totalorder %s15, 1
      %p40 = scmp.ne.s32.totalorder %s35, %s37
      %p41 = scmp.eq.s32.totalorder %s15, 0
      %p42 = por %p40, %p41
      %p43 = scmp.ne.s32.totalorder %s35, %s37
      %p44 = scmp.eq.s32.totalorder %s20, 1
      %p45 = por %p43, %p44
      %p46 = scmp.ne.s32.totalorder %s37, %s38
      %p47 = scmp.eq.s32.totalorder %s20, 0
      %p48 = por %p46, %p47
      %p49 = scmp.ne.s32.totalorder %s37, %s38
      %p50 = scmp.eq.s32.totalorder %s21, 1
      %p51 = por %p49, %p50
      %p53 = scmp.ne.s32.totalorder %s38, %s52
      %p54 = scmp.eq.s32.totalorder %s21, 0
      %p55 = por %p53, %p54
      %s56 = ssub.s32 %s22, %s34
      %s57 = ssub.s32 %s23, %s30
      %s58 = sor.u32 %s56, %s57
      %p59 = scmp.eq.s32.totalorder %s58, 0
      %s61 = sadd.s32 %s60, 1
      %s62 = scalar_select %p59, %s60, %s61
      %p65 = pneg %p59
      %p66 = scmp.eq.s32.totalorder %s15, 1
      %p67 = por %p65, %p66
      %p68 = scmp.ne.s32.totalorder %s60, %s63
      %p69 = scmp.eq.s32.totalorder %s15, 0
      %p70 = por %p68, %p69
      %p71 = scmp.ne.s32.totalorder %s60, %s63
      %p72 = scmp.eq.s32.totalorder %s20, 1
      %p73 = por %p71, %p72
      %p74 = scmp.ne.s32.totalorder %s63, %s64
      %p75 = scmp.eq.s32.totalorder %s20, 0
      %p76 = por %p74, %p75
      %p77 = scmp.ne.s32.totalorder %s63, %s64
      %p78 = scmp.eq.s32.totalorder %s21, 1
      %p79 = por %p77, %p78
      %p81 = scmp.ne.s32.totalorder %s64, %s80
      %p82 = scmp.eq.s32.totalorder %s21, 0
      %p83 = por %p81, %p82
      %s85 = sadd.s32 %s84, 1
      %p88 = scmp.eq.s32.totalorder %s15, 1
      %p89 = scmp.ne.s32.totalorder %s84, %s86
      %p90 = scmp.eq.s32.totalorder %s15, 0
      %p91 = por %p89, %p90
      %p92 = scmp.ne.s32.totalorder %s84, %s86
      %p93 = scmp.eq.s32.totalorder %s20, 1
      %p94 = por %p92, %p93
      %p95 = scmp.ne.s32.totalorder %s86, %s87
      %p96 = scmp.eq.s32.totalorder %s20, 0
      %p97 = por %p95, %p96
      %p98 = scmp.ne.s32.totalorder %s86, %s87
      %p99 = scmp.eq.s32.totalorder %s21, 1
      %p100 = por %p98, %p99
      %p102 = scmp.ne.s32.totalorder %s87, %s101
      %p103 = scmp.eq.s32.totalorder %s21, 0
      %p104 = por %p102, %p103
      %s105 = ssub.s32 %s22, %s34
      %s106 = ssub.s32 %s23, %s30
      %s107 = sor.u32 %s105, %s106
      %p108 = scmp.eq.s32.totalorder %s107, 0
      %s110 = sadd.s32 %s109, 1
      %s111 = scalar_select %p108, %s109, %s110
      %p114 = pneg %p108
      %p115 = scmp.eq.s32.totalorder %s15, 1
      %p116 = por %p114, %p115
      %p117 = scmp.ne.s32.totalorder %s109, %s112
      %p118 = scmp.eq.s32.totalorder %s15, 0
      %p119 = por %p117, %p118
      %p120 = scmp.ne.s32.totalorder %s109, %s112
      %p121 = scmp.eq.s32.totalorder %s20, 1
      %p122 = por %p120, %p121
      %p123 = scmp.ne.s32.totalorder %s112, %s113
      %p124 = scmp.eq.s32.totalorder %s20, 0
      %p125 = por %p123, %p124
      %p126 = scmp.ne.s32.totalorder %s112, %s113
      %p127 = scmp.eq.s32.totalorder %s21, 1
      %p128 = por %p126, %p127
      %p130 = scmp.ne.s32.totalorder %s113, %s129
      %p131 = scmp.eq.s32.totalorder %s21, 0
      %p132 = por %p130, %p131
      %p133 = scmp.le.s32.totalorder 1, %s15
      %p134 = scmp.lt.s32.totalorder %s15, 3
      %p135 = pnand %p133, %p134
      %p136 = pneg %p135
      // Predicated region
      $region9: #{tpu_custom_call.1} parent=5 // pred_check
        _
      $region10: #{tpu_custom_call.1} parent=5 // pred_check_branch
        %138 = sbr.rel (%p135) target = $region12
      $region11: #{tpu_custom_call.1} parent=5 // pred_region
        %s139 = ssub.s32 %s15, 1
        // Predicated region
        $region13: #{tpu_custom_call.1} parent=11 // pred_check
          %p140 = pneg %p48
        $region14: #{tpu_custom_call.1} parent=11 // pred_check_branch
          %142 = sbr.rel (%p140) target = $region16
        $region15: #{tpu_custom_call.1} parent=11 // pred_region
          _
        $region16: #{tpu_custom_call.1} parent=11 // pred_fallthru
          _
        // Predicated region
        $region17: #{tpu_custom_call.1} parent=11 // pred_check
          %p143 = pneg %p97
        $region18: #{tpu_custom_call.1} parent=11 // pred_check_branch
          %145 = sbr.rel (%p143) target = $region20
        $region19: #{tpu_custom_call.1} parent=11 // pred_region
          _
        $region20: #{tpu_custom_call.1} parent=11 // pred_fallthru
          _
      $region12: #{tpu_custom_call.1} parent=5 // pred_fallthru
        _
      %p146 = scmp.lt.s32.totalorder %s15, 2
      // Predicated region
      $region21: #{tpu_custom_call.1} parent=5 // pred_check
        %p147 = pneg %p146
      $region22: #{tpu_custom_call.1} parent=5 // pred_check_branch
        %149 = sbr.rel (%p147) target = $region24
      $region23: #{tpu_custom_call.1} parent=5 // pred_region
        // Predicated region
        $region25: #{tpu_custom_call.1} parent=23 // pred_check
          %p150 = pneg %p70
        $region26: #{tpu_custom_call.1} parent=23 // pred_check_branch
          %152 = sbr.rel (%p150) target = $region28
        $region27: #{tpu_custom_call.1} parent=23 // pred_region
          %s153 = sand.u32 %s60, 1
          %s154 = scalar_lea.sflag [#allocation3], %s153
          %s155 = sand.u32 %s60, 1
          %s156 = smul.addr %s155, 8
          %s157 = scalar_lea.vmem [#allocation2], %s156
          %s159 = ssub.s32 128, 128
          %160 = vsyncadd %s154, %s159
          %s161 = smul.addr %s22, 2
          %s162 = sadd.s32 %s23, %s161
          %s163 = smul.addr %s162, 64
          %s164 = scalar_lea.hbm %s1, %s163
          %s165 = sshll.u32 %s157, 4
          %s166 = int_to_ptr.vmem [resolvable:$true] %s165
          %171 = dma.hbm_to_vmem [thread:$0]  %s164, 128, %s166, %s154, 64, 64, 4
        $region28: #{tpu_custom_call.1} parent=23 // pred_fallthru
          _
      $region24: #{tpu_custom_call.1} parent=5 // pred_fallthru
        _
      %p172 = scmp.le.s32.totalorder 1, %s15
      %p173 = scmp.lt.s32.totalorder %s15, 3
      %p174 = pnand %p172, %p173
      %p175 = pneg %p174
      // Predicated region
      $region29: #{tpu_custom_call.1} parent=5 // pred_check
        _
      $region30: #{tpu_custom_call.1} parent=5 // pred_check_branch
        %177 = sbr.rel (%p174) target = $region32
      $region31: #{tpu_custom_call.1} parent=5 // pred_region
        %s178 = ssub.s32 %s15, 1
        %s179 = sand.u32 %s63, 1
        %s180 = scalar_lea.sflag [#allocation3], %s179
        %s181 = sand.u32 %s63, 1
        %s182 = smul.addr %s181, 8
        %s183 = scalar_lea.vmem [#allocation2], %s182
        // Predicated region
        $region33: #{tpu_custom_call.1} parent=31 // pred_check
          %p184 = pneg %p76
        $region34: #{tpu_custom_call.1} parent=31 // pred_check_branch
          %186 = sbr.rel (%p184) target = $region36
        $region35: #{tpu_custom_call.1} parent=31 // pred_region
          %187 = dma.done %s180, 128
        $region36: #{tpu_custom_call.1} parent=31 // pred_fallthru
          _
        %p188 = pneg %p48
        %p189 = pneg %p45
        %s190 = sand.u32 %s63, 1
        %s191 = scalar_lea.sflag [#allocation3], %s190
        %s192 = sand.u32 %s63, 1
        %s193 = smul.addr %s192, 8
        %s194 = scalar_lea.vmem [#allocation2], %s193
        %p195 = pneg %p76
        %p196 = pneg %p73
        %p197 = pneg %p97
        %p198 = pneg %p94
        %p199 = pneg %p125
        %p200 = pneg %p122
        %s201 = sand.u32 %s112, 1
        %s202 = scalar_lea.sflag [#allocation4], %s201
        %s203 = sand.u32 %s112, 1
        %s204 = smul.addr %s203, 4
        %s205 = scalar_lea.vmem [#allocation5], %s204
        %v207 = vld [vmem:[%s0] sm:$0xf]
        %v208 = vld [vmem:[%s183] sm:$0xf]
        %v209 = vld [vmem:[%s183 + $0x4] sm:$0xf]
        %v210 = vld [vmem:[%s2] sm:$0xff]
        %212 = vset.pattern.permute.xlu0 0
        %213 = vperm.xlu0 %212, %v210
        %v214 = vpop.permute.xlu0 %213
        %v218 = vunpack.c.l.b16 %v208
        %v219 = vunpack.c.l.b16 %v209
        %v220 = vpack.c.b16 %v219, %v218
        %vm222 = vcmask 130048
        %v224 = vsel %vm222, %v207, 0
        %226 = vmatprep.subr.bf16.mxu0 0
        %227 = vmatpush1.bf16.msra.mxu0 0
        %228 = vmatprep.subr.bf16.mxu0 0
        %229 = vmatpush1.bf16.msra.mxu0 0
        %230 = vmatprep.subr.bf16.mxu0 0
        %231 = vmatpush1.bf16.msra.mxu0 0
        %232 = vmatprep.subr.bf16.mxu0 0
        %233 = vmatpush1.bf16.msra.mxu0 0
        %234 = vmatprep.subr.bf16.mxu0 0
        %235 = vmatpush1.bf16.msra.mxu0 0
        %236 = vmatprep.subr.bf16.mxu0 0
        %237 = vmatpush1.bf16.msra.mxu0 0
        %238 = vmatprep.subr.bf16.mxu0 0
        %239 = vmatpush1.bf16.msra.mxu0 0
        %240 = vmatprep.subr.bf16.mxu0 0
        %241 = vmatpush1.bf16.msra.mxu0 %v220
        %242 = vmatprep.subr.bf16.mxu0 0
        %243 = vmatpush2.bf16.msra.mxu0 0
        %244 = vmatprep.subr.bf16.mxu0 0
        %245 = vmatpush2.bf16.msra.mxu0 0
        %246 = vmatprep.subr.bf16.mxu0 0
        %247 = vmatpush2.bf16.msra.mxu0 0
        %248 = vmatprep.subr.bf16.mxu0 0
        %249 = vmatpush2.bf16.msra.mxu0 0
        %250 = vmatprep.subr.bf16.mxu0 0
        %251 = vmatpush2.bf16.msra.mxu0 0
        %252 = vmatprep.subr.bf16.mxu0 0
        %253 = vmatpush2.bf16.msra.mxu0 0
        %254 = vmatprep.subr.bf16.mxu0 0
        %255 = vmatpush2.bf16.msra.mxu0 0
        %256 = vmatprep.subr.bf16.mxu0 0
        %257 = vmatpush2.bf16.msra.mxu0 0
        %258 = vmatprep.mubr.bf16.mxu0 0
        %259 = vmatmul.mubr.bf16.gmra.mxu0 %v224
        %v260 = vpop.f32.mrf.mxu0
        %v261 = vadd.f32 %v214, %v260
        %v262 = vpop.f32.mrf.mxu0
        %v263 = vpop.f32.mrf.mxu0
        %v264 = vpop.f32.mrf.mxu0
        %265 = vdwg.mxu0
        %v266 = vsub.f32 0.0, %v261
        %v267 = vmul.f32 %v266, 1.442695
        %v268 = vpow.pop %v267
        %v269 = vadd.f32 %v268, 1.0
        %v270 = vrcp.pop %v269
        %v271 = vmul.f32 %v261, %v270
        %v272 = vpack.c.bf16 %v271, %v271
        %vm273 = vcmask 519168
        %274 = vst.msk [vmem:[%s205] sm:$0xf] %vm273, %v272
        %s275 = sand.u32 %s112, 1
        %s276 = scalar_lea.sflag [#allocation4], %s275
        %s277 = sand.u32 %s112, 1
        %s278 = smul.addr %s277, 4
        %s279 = scalar_lea.vmem [#allocation5], %s278
        // Predicated region
        $region37: #{tpu_custom_call.1} parent=31 // pred_check
          %p280 = pneg %p122
        $region38: #{tpu_custom_call.1} parent=31 // pred_check_branch
          %282 = sbr.rel (%p280) target = $region40
        $region39: #{tpu_custom_call.1} parent=31 // pred_region
          %s284 = ssub.s32 64, 64
          %285 = vsyncadd %s276, %s284
          %s286 = sadd.s32 %s25, %s24
          %s287 = smul.addr %s286, 64
          %s288 = scalar_lea.hbm %s3, %s287
          %s290 = sshll.u32 %s279, 4
          %s291 = int_to_ptr.vmem [resolvable:$true] %s290
          %293 = dma.vmem_to_hbm [thread:$0]  %s291, 64, %s288, %s276
        $region40: #{tpu_custom_call.1} parent=31 // pred_fallthru
          _
      $region32: #{tpu_custom_call.1} parent=5 // pred_fallthru
        _
      %p294 = scmp.le.s32.totalorder 2, %s15
      // Predicated region
      $region41: #{tpu_custom_call.1} parent=5 // pred_check
        %p295 = pneg %p294
      $region42: #{tpu_custom_call.1} parent=5 // pred_check_branch
        %297 = sbr.rel (%p295) target = $region44
      $region43: #{tpu_custom_call.1} parent=5 // pred_region
        %s298 = ssub.s32 %s15, 2
        // Predicated region
        $region45: #{tpu_custom_call.1} parent=43 // pred_check
          %p299 = pneg %p128
        $region46: #{tpu_custom_call.1} parent=43 // pred_check_branch
          %301 = sbr.rel (%p299) target = $region48
        $region47: #{tpu_custom_call.1} parent=43 // pred_region
          %s302 = sand.u32 %s113, 1
          %s303 = scalar_lea.sflag [#allocation4], %s302
          %s304 = sand.u32 %s113, 1
          %s305 = smul.addr %s304, 4
          %s306 = scalar_lea.vmem [#allocation5], %s305
          %307 = dma.done %s303, 64
        $region48: #{tpu_custom_call.1} parent=43 // pred_fallthru
          _
      $region44: #{tpu_custom_call.1} parent=5 // pred_fallthru
        _
    $region6: #{tpu_custom_call.1} parent=1 // loop_footer
      %s19 = sadd.s32 1, %s15
    $region7: #{tpu_custom_call.1} parent=1 // loop_footer_branch
      %14 = sbr.rel target = $region3
    $region8: #{tpu_custom_call.1} parent=1 // loop_exit
      _
    %308 = vsyncpa [#allocation3], 1
    %s309 = scalar_lea.sflag [#allocation3], 1
    %310 = vsyncpa %s309, 1
    %311 = vsyncpa [#allocation4], 1
    %s312 = scalar_lea.sflag [#allocation4], 1
    %313 = vsyncpa %s312, 1

</llo_original>
